<compile_context>
chip_gen: v6e
topology: v6e:2x2x1
jax: 0.10.0
libtpu: 0.0.40
codegen_flags: <defaults>
</compile_context>

<pallas_src>
import math

import jax
import jax.numpy as jnp
from jax.experimental import pallas as pl
from jax.experimental.pallas import tpu as pltpu


# At most this many DMAs are kept in flight (a handful of large chunks is
# enough to saturate HBM; descriptor overhead is negligible).
_MAX_OUTSTANDING_DMAS = 4


def _make_dma_copy_kernel(chunks):
    """HBM->HBM identity copy via a few outstanding chunked DMAs.

    `chunks` is a static list of (start_row, n_rows) tuples covering the
    whole (rows, lane) slab.  All chunk copies are started, then waited on.
    """

    def kernel(x_hbm, o_hbm, sem):
        descs = []
        for i, (r0, nr) in enumerate(chunks):
            cp = pltpu.make_async_copy(
                x_hbm.at[pl.ds(r0, nr)],
                o_hbm.at[pl.ds(r0, nr)],
                sem.at[i],
            )
            cp.start()
            descs.append(cp)
        for cp in descs:
            cp.wait()

    return kernel


def _choose_2d_layout(total):
    """Contiguous (rows, lane) view of `total` elements, lane % 128 == 0 if possible."""
    for lane in (2048, 1024, 512, 256, 128):
        if total % lane == 0:
            return total // lane, lane
    # Arbitrary contiguous shape: DMA still handles it (identical layout on
    # both sides), just with sub-lane granularity.
    return 1, total


def _row_chunks(rows, max_chunks=_MAX_OUTSTANDING_DMAS):
    """Split `rows` into <= max_chunks contiguous, 8-row-aligned chunks."""
    n = max(1, min(max_chunks, rows))
    base = -(-rows // n)  # ceil div
    if rows >= 8 and base % 8:
        base = ((base + 7) // 8) * 8  # sublane-aligned chunk boundaries
    chunks, r0 = [], 0
    while r0 < rows:
        nr = min(base, rows - r0)
        chunks.append((r0, nr))
        r0 += nr
    return chunks


def _resolve_out_shape(x, target_shape):
    """torch.view semantics: output shape is (batch,) + target_shape, one -1 allowed."""
    b = x.shape[0]
    flat = math.prod(x.shape[1:]) if x.ndim > 1 else 1
    resolved = list(target_shape)
    if resolved.count(-1) > 1:
        raise ValueError("only one -1 dimension is allowed in the target shape")
    if -1 in resolved:
        idx = resolved.index(-1)
        known = math.prod(d for d in resolved if d != -1)
        if known == 0 or flat % known:
            raise ValueError("target shape incompatible with input")
        resolved[idx] = flat // known
    if math.prod(resolved) != flat:
        raise ValueError("target shape incompatible with input")
    return (b,) + tuple(resolved)


def pallas_reshape(x, target_shape, *, force_kernel=False):
    """Equivalent of Reshape(*target_shape)(x) == x.view((x.shape[0],) + target_shape)."""
    out_shape = _resolve_out_shape(x, target_shape)

    # Default path: contiguous reshape is metadata-only — free in XLA.
    if not force_kernel:
        return jnp.reshape(x, out_shape)

    total = math.prod(x.shape)
    if total == 0:
        return jnp.reshape(x, out_shape)

    itemsize = jnp.dtype(x.dtype).itemsize
    nbytes = total * itemsize

    rows, lane = _choose_2d_layout(total)
    chunks = _row_chunks(rows)

    # Row-major (rows, lane) view matches the contiguous .view layout.
    x2d = jnp.reshape(x, (rows, lane))

    out2d = pl.pallas_call(
        _make_dma_copy_kernel(chunks),
        out_shape=jax.ShapeDtypeStruct((rows, lane), x.dtype),
        in_specs=[pl.BlockSpec(memory_space=pl.ANY)],   # stay in HBM, no auto-DMA
        out_specs=pl.BlockSpec(memory_space=pl.ANY),    # written directly by DMA
        scratch_shapes=[pltpu.SemaphoreType.DMA((len(chunks),))],
        cost_estimate=pl.CostEstimate(
            flops=0, transcendentals=0, bytes_accessed=2 * nbytes
        ),
    )(x2d)

    return jnp.reshape(out2d, out_shape)


if __name__ == "__main__":
    key = jax.random.PRNGKey(0)

    # Spec-sized NCHW input; emulate Reshape(4 * 16 * 16): output (B, 1024).
    x = jax.random.normal(key, (2, 4, 16, 16), dtype=jnp.float32)
    target_shape = (4 * 16 * 16,)
    ref = jnp.reshape(x, (x.shape[0],) + target_shape)

    # Default path: free metadata-only reshape.
    out_default = jax.block_until_ready(pallas_reshape(x, target_shape))
    assert out_default.shape == (2, 1024)
    assert out_default.dtype == x.dtype
    assert bool(jnp.all(out_default == ref))

    # Forced kernel path on the spec shape: single-chunk HBM->HBM DMA copy.
    out_kernel = jax.block_until_ready(
        pallas_reshape(x, target_shape, force_kernel=True)
    )
    assert out_kernel.shape == (2, 1024)
    assert out_kernel.dtype == x.dtype
    assert bool(jnp.all(out_kernel == ref))

    # Larger input (4 MiB) with -1 resolution: exercises the multi-chunk
    # (4 outstanding DMAs over a (512, 2048) f32 slab) kernel path.
    x2 = jax.random.normal(jax.random.PRNGKey(0), (8, 64, 64, 32), dtype=jnp.float32)
    out2 = jax.block_until_ready(pallas_reshape(x2, (-1,), force_kernel=True))
    ref2 = jnp.reshape(x2, (8, -1))
    assert out2.shape == (8, 64 * 64 * 32)
    assert bool(jnp.all(out2 == ref2))

    # Larger input through the default (metadata-only) path.
    out3 = jax.block_until_ready(pallas_reshape(x2, (-1,)))
    assert bool(jnp.all(out3 == ref2))

    print("KERNEL_OK")
</pallas_src>

<mosaic_0001>
module attributes {stable_mosaic.version = 11 : i64} {
  func.func @kernel(%arg0: memref<1x2048xf32, #tpu.memory_space<any>>, %arg1: memref<1x2048xf32, #tpu.memory_space<any>>, %arg2: memref<1x!tpu.dma_semaphore, #tpu.memory_space<semaphore_mem>>) attributes {dimension_semantics = [], scalar_prefetch = 0 : i64, scratch_operands = 1 : i64, tpu.core_type = #tpu.core_type<tc>} {
    %c0_i32 = arith.constant 0 : i32
    %c0_i32_0 = arith.constant 0 : i32
    %c0_i32_1 = arith.constant 0 : i32
    %0 = tpu.memref_slice %arg0[%c0_i32_0, %c0_i32_1] : memref<1x2048xf32, #tpu.memory_space<any>> -> memref<1x2048xf32, #tpu.memory_space<any>>
    %c0_i32_2 = arith.constant 0 : i32
    %c0_i32_3 = arith.constant 0 : i32
    %1 = tpu.memref_slice %arg1[%c0_i32_2, %c0_i32_3] : memref<1x2048xf32, #tpu.memory_space<any>> -> memref<1x2048xf32, #tpu.memory_space<any>>
    %2 = tpu.memref_slice %arg2[%c0_i32] : memref<1x!tpu.dma_semaphore, #tpu.memory_space<semaphore_mem>> -> memref<1x!tpu.dma_semaphore, #tpu.memory_space<semaphore_mem>>
    %3 = tpu.memref_squeeze %2 : memref<1x!tpu.dma_semaphore, #tpu.memory_space<semaphore_mem>> -> memref<!tpu.dma_semaphore, #tpu.memory_space<semaphore_mem>>
    tpu.enqueue_dma source(%0 : memref<1x2048xf32, #tpu.memory_space<any>>) target(%1 : memref<1x2048xf32, #tpu.memory_space<any>>) target_semaphore(%3 : memref<!tpu.dma_semaphore, #tpu.memory_space<semaphore_mem>>)
    %c0_i32_4 = arith.constant 0 : i32
    %c0_i32_5 = arith.constant 0 : i32
    %c0_i32_6 = arith.constant 0 : i32
    %4 = tpu.memref_slice %arg0[%c0_i32_5, %c0_i32_6] : memref<1x2048xf32, #tpu.memory_space<any>> -> memref<1x2048xf32, #tpu.memory_space<any>>
    %c0_i32_7 = arith.constant 0 : i32
    %c0_i32_8 = arith.constant 0 : i32
    %5 = tpu.memref_slice %arg1[%c0_i32_7, %c0_i32_8] : memref<1x2048xf32, #tpu.memory_space<any>> -> memref<1x2048xf32, #tpu.memory_space<any>>
    %6 = tpu.memref_slice %arg2[%c0_i32_4] : memref<1x!tpu.dma_semaphore, #tpu.memory_space<semaphore_mem>> -> memref<1x!tpu.dma_semaphore, #tpu.memory_space<semaphore_mem>>
    %7 = tpu.memref_squeeze %6 : memref<1x!tpu.dma_semaphore, #tpu.memory_space<semaphore_mem>> -> memref<!tpu.dma_semaphore, #tpu.memory_space<semaphore_mem>>
    tpu.wait_dma2 semaphore(%7 : memref<!tpu.dma_semaphore, #tpu.memory_space<semaphore_mem>>) src(%4 : memref<1x2048xf32, #tpu.memory_space<any>>) dst(%5 : memref<1x2048xf32, #tpu.memory_space<any>>)
    return
  }
}

</mosaic_0001>

<llo_original>
// kernel: tpu_custom_call.1
$region0: #{tpu_custom_call.1}
  #allocation0 [shape = 'u32[]', space=smem, size = 0x4, offset = 0x4, fixed_abs, tag = 'smem constant byte address 0x4 - core index']
  #allocation1 [shape = 'u32[144,128]{1,0:T(1,128)}', space=vmem, size = 0x12000, scoped, tag = 'internal scratch']
  #allocation2 [shape = 's32[1]{0}', space=sflag, size = 0x4, scoped, tag = 'scratch operand']
  #allocation3 [shape = 's32[]', space=sflag, size = 0x4, offset = 0, fixed_abs, tag = 'sflag constant byte address 0x0 - dummy sync flag']
  #allocation4 [shape = 'u32[0]{0}', space=smem, size = 0, offset = 0, fixed_abs, tag = 'smem constant byte address 0x0 - null']
  %s0 = inlined_call_operand.hbm [shape: f32[1,2048], index: 0, kind: input, shape index: {}]
  %s1 = inlined_call_operand.hbm [shape: f32[1,2048], index: 1, kind: output, shape index: {}]
  %s2 = sld [smem:[#allocation0]]
  $region2: #{tpu_custom_call.1} parent=0
    _
  %s4 = ssub.s32 1, %s2
  %s5 = scalar_select 0, %s4, %s2
  %s7 = sshll.u32 1, 14
  %s8 = sxor.u32 4294967295, %s7
  %12 = dma.general %s0, 256, %s1, [#allocation2], 131072, [#allocation4], 0, 0
  %s13 = smul.u32 1, 16
  %s14 = sshll.u32 %s13, 4
  %15 = dma.done [#allocation2], %s14
  %16 = vsyncmov [#allocation2]
  %s17 = vpop.sfrf %16
  %p18 = scmp.eq.s32.totalorder %s17, 0
  %p19 = pneg %p18
  %21 = shalt.err (%p19)

</llo_original>
